<compile_context>
chip_gen: v6e
topology: v6e:2x2x1
jax: 0.10.0
libtpu: 0.0.40
codegen_flags: <defaults>
</compile_context>

<pallas_src>
import functools

import jax
import jax.numpy as jnp
import numpy as np
from jax.experimental import pallas as pl
from jax.experimental.pallas import tpu as pltpu

HIDDEN = 512


def patch_embed_kernel(x_ref, w_ref, pos_ref, o_ref, *, batches_per_block):
    # x_ref:   (BB*P, patch_size*F)  flattened patch rows for BB batch elements
    # w_ref:   (patch_size*F, HIDDEN) folded weight (patch mean folded into matmul)
    # pos_ref: (P, HIDDEN)            positional embedding + linear bias (resident)
    # o_ref:   (BB*P, HIDDEN)         lane-dense output (512 lanes)
    y = jnp.dot(x_ref[...], w_ref[...], preferred_element_type=jnp.float32)
    add = jnp.tile(pos_ref[...], (batches_per_block, 1))   # broadcast pos over batches
    o_ref[...] = (y + add).astype(o_ref.dtype)


def patch_embedding_forward(x, w, b, pos_emb, *, num_patches, patch_size):
    """x: (B, seq_len, F) with F == patch_size; returns (B, HIDDEN, num_patches)."""
    B, seq_len, F = x.shape
    assert seq_len == num_patches * patch_size
    P = num_patches
    K = patch_size * F          # contraction dim after folding the mean (256 for spec)
    M = B * P                   # total output rows

    # Wrapper-side prep (layout plumbing, not compute-hoisting):
    #   fold the 1/patch_size mean into the weight and flatten x rows.
    x2 = x.reshape(M, K)
    w_folded = jnp.tile(w.astype(jnp.float32) / patch_size, (patch_size, 1))  # (K, HIDDEN)
    pos_bias = pos_emb[:P].astype(jnp.float32) + b.astype(jnp.float32)[None, :]  # (P, HIDDEN)

    # Tile the grid over whole batch elements, aiming for ~256 rows per step,
    # while keeping block row counts (8,128)-legal.
    target_rows = 256
    bb = max(1, min(B, target_rows // max(P, 1)))
    while bb > 1 and (B % bb != 0 or (bb * P) % 8 != 0):
        bb -= 1
    if B % bb != 0 or ((bb * P) % 8 != 0 and bb * P != M):
        bb = B                   # fall back to a single full-array grid step
    rows_per_block = bb * P
    grid = (B // bb,)

    kernel = functools.partial(patch_embed_kernel, batches_per_block=bb)

    out2 = pl.pallas_call(
        kernel,
        out_shape=jax.ShapeDtypeStruct((M, HIDDEN), x.dtype),
        grid_spec=pltpu.PrefetchScalarGridSpec(
            num_scalar_prefetch=0,
            grid=grid,
            in_specs=[
                pl.BlockSpec((rows_per_block, K), lambda i: (i, 0)),
                pl.BlockSpec((K, HIDDEN), lambda i: (0, 0)),
                pl.BlockSpec((P, HIDDEN), lambda i: (0, 0)),
            ],
            out_specs=pl.BlockSpec((rows_per_block, HIDDEN), lambda i: (i, 0)),
        ),
        compiler_params=pltpu.CompilerParams(
            dimension_semantics=("parallel",),
            vmem_limit_bytes=64 * 1024 * 1024,
        ),
    )(x2, w_folded, pos_bias)

    # permute(0, 2, 1) done in the wrapper (downstream layout decision),
    # keeping the kernel's stores lane-dense.
    return jnp.transpose(out2.reshape(B, P, HIDDEN), (0, 2, 1))


def reference_forward(x, w, b, pos_emb, *, num_patches, patch_size):
    B, seq_len, F = x.shape
    x4 = x.reshape(B, num_patches, patch_size, F)
    pf = jnp.mean(x4, axis=2)
    emb = jnp.einsum("bpf,fh->bph", pf, w) + b[None, None, :]
    emb = emb + pos_emb[None, :num_patches, :]
    return jnp.transpose(emb, (0, 2, 1))


if __name__ == "__main__":
    # Small shapes consistent with the module: patch_size=16, num_patches=8
    # -> seq_len=128; feature dim F must equal patch_size for the Linear to apply.
    B = 2
    patch_size = 16
    num_patches = 8
    seq_len = num_patches * patch_size
    F = patch_size

    key = jax.random.PRNGKey(0)
    kx, kw, kb, kp = jax.random.split(key, 4)

    x = jax.random.normal(kx, (B, seq_len, F), dtype=jnp.float32)
    # nn.Linear(patch_size, 512): weight (512, patch_size); kept transposed here.
    w = jax.random.normal(kw, (patch_size, HIDDEN), dtype=jnp.float32) * 0.02
    b = jax.random.normal(kb, (HIDDEN,), dtype=jnp.float32) * 0.02
    # nn.Embedding(num_patches + 1, 512)
    pos_emb = jax.random.normal(kp, (num_patches + 1, HIDDEN), dtype=jnp.float32) * 0.02

    out = patch_embedding_forward(x, w, b, pos_emb,
                                  num_patches=num_patches, patch_size=patch_size)
    out = jax.block_until_ready(out)

    ref = reference_forward(x, w, b, pos_emb,
                            num_patches=num_patches, patch_size=patch_size)
    assert out.shape == (B, HIDDEN, num_patches), out.shape
    np.testing.assert_allclose(np.asarray(out), np.asarray(ref), rtol=1e-5, atol=1e-5)
    print("KERNEL_OK")
</pallas_src>

<mosaic_0001>
module attributes {stable_mosaic.version = 11 : i64} {
  func.func @patch_embed_kernel(%arg0: i32, %arg1: memref<16x256xf32, #tpu.memory_space<vmem>>, %arg2: memref<256x512xf32, #tpu.memory_space<vmem>>, %arg3: memref<8x512xf32, #tpu.memory_space<vmem>>, %arg4: memref<16x512xf32, #tpu.memory_space<vmem>>) attributes {dimension_semantics = [#tpu.dimension_semantics<parallel>], iteration_bounds = array<i64: 1>, scalar_prefetch = 0 : i64, scratch_operands = 0 : i64, tpu.core_type = #tpu.core_type<tc>, window_params = [{transform_indices = @transform_0, window_bounds = array<i64: 16, 256>}, {pipeline_mode = #tpu.pipeline_mode<synchronous>, transform_indices = @transform_1, window_bounds = array<i64: 256, 512>}, {pipeline_mode = #tpu.pipeline_mode<synchronous>, transform_indices = @transform_2, window_bounds = array<i64: 8, 512>}, {transform_indices = @transform_3, window_bounds = array<i64: 16, 512>}]} {
    %c0 = arith.constant 0 : index
    %c0_0 = arith.constant 0 : index
    %0 = vector.load %arg1[%c0, %c0_0] : memref<16x256xf32, #tpu.memory_space<vmem>>, vector<16x256xf32>
    %c0_1 = arith.constant 0 : index
    %c0_2 = arith.constant 0 : index
    %1 = vector.load %arg2[%c0_1, %c0_2] : memref<256x512xf32, #tpu.memory_space<vmem>>, vector<256x512xf32>
    %cst = arith.constant dense<0.000000e+00> : vector<16x512xf32>
    %2 = tpu.matmul %0, %1, %cst {dimension_numbers = #tpu.dot_dimension_numbers<[1], [0], [0], [1], [0, 0, 1, 1], [], []>} : vector<16x256xf32>, vector<256x512xf32>, vector<16x512xf32> -> vector<16x512xf32>
    %c0_3 = arith.constant 0 : index
    %c0_4 = arith.constant 0 : index
    %3 = vector.load %arg3[%c0_3, %c0_4] : memref<8x512xf32, #tpu.memory_space<vmem>>, vector<8x512xf32>
    %4 = tpu.concatenate %3, %3 in 0 : vector<8x512xf32>, vector<8x512xf32> -> vector<16x512xf32>
    %5 = arith.addf %2, %4 : vector<16x512xf32>
    %c0_5 = arith.constant 0 : index
    %c0_6 = arith.constant 0 : index
    %6 = vector.load %arg4[%c0_5, %c0_6] : memref<16x512xf32, #tpu.memory_space<vmem>>, vector<16x512xf32>
    tpu.vector_store %arg4[%c0_5, %c0_6], %5 {strides = array<i32>} : memref<16x512xf32, #tpu.memory_space<vmem>>, vector<16x512xf32>,
    return
  }
  func.func @transform_0(%arg0: i32) -> (i32, i32) {
    %c0_i32 = arith.constant 0 : i32
    %c0_i32_0 = arith.constant 0 : i32
    return %arg0, %c0_i32 : i32, i32
  }
  func.func @transform_1(%arg0: i32) -> (i32, i32) {
    %c0_i32 = arith.constant 0 : i32
    %c0_i32_0 = arith.constant 0 : i32
    %c0_i32_1 = arith.constant 0 : i32
    return %c0_i32, %c0_i32_0 : i32, i32
  }
  func.func @transform_2(%arg0: i32) -> (i32, i32) {
    %c0_i32 = arith.constant 0 : i32
    %c0_i32_0 = arith.constant 0 : i32
    %c0_i32_1 = arith.constant 0 : i32
    return %c0_i32, %c0_i32_0 : i32, i32
  }
  func.func @transform_3(%arg0: i32) -> (i32, i32) {
    %c0_i32 = arith.constant 0 : i32
    %c0_i32_0 = arith.constant 0 : i32
    return %arg0, %c0_i32 : i32, i32
  }
}

</mosaic_0001>

<llo_original>
// kernel: tpu_custom_call.1
$region0: #{tpu_custom_call.1}
  #allocation0 [shape = 'u32[]', space=smem, size = 0x4, offset = 0x4, fixed_abs, tag = 'smem constant byte address 0x4 - core index']
  #allocation1 [shape = 'u32[144,128]{1,0:T(1,128)}', space=vmem, size = 0x12000, scoped, tag = 'internal scratch']
  %s0 = inlined_call_operand.hbm [shape: f32[16,256], index: 0, kind: input, shape index: {}]
  %s1 = inlined_call_operand.hbm [shape: f32[256,512], index: 1, kind: input, shape index: {}]
  %s2 = inlined_call_operand.hbm [shape: f32[8,512], index: 2, kind: input, shape index: {}]
  %s3 = inlined_call_operand.hbm [shape: f32[16,512], index: 3, kind: output, shape index: {}]
  %s4 = sld [smem:[#allocation0]]
  $region34: #{tpu_custom_call.1} parent=0
    _
  %s6 = ssub.s32 1, %s4
  %s7 = scalar_select 0, %s6, %s4
  $region1: #{tpu_custom_call.1} parent=0
    #allocation2 [shape = 'u8[16384]{0}', space=vmem, size = 0x4000, scoped, tag = 'input window, operand 0, single buffered']
    #allocation3 [shape = 's32[1]{0}', space=sflag, size = 0x4, scoped, tag = 'scoped memory for tpu_custom_call.1']
    #allocation4 [shape = 's32[1]{0}', space=sflag, size = 0x4, scoped, tag = 'scoped memory for tpu_custom_call.1']
    #allocation5 [shape = 'u8[524288]{0}', space=vmem, size = 0x80000, scoped, tag = 'input window, operand 1, single buffered']
    #allocation6 [shape = 's32[1]{0}', space=sflag, size = 0x4, scoped, tag = 'scoped memory for tpu_custom_call.1']
    #allocation7 [shape = 'u8[16384]{0}', space=vmem, size = 0x4000, scoped, tag = 'input window, operand 2, single buffered']
    #allocation8 [shape = 'u8[32768]{0}', space=vmem, size = 0x8000, scoped, tag = 'output window, operand 0, single buffered']
    %8 = vsyncpa [#allocation3], 0
    %9 = vsyncpa [#allocation6], 0
    %10 = vsyncpa [#allocation4], 0
    // Predicated region
    $region2: #{tpu_custom_call.1} parent=1 // pred_check
      _
    $region3: #{tpu_custom_call.1} parent=1 // pred_check_branch
      %12 = sbr.rel (0) target = $region5
    $region4: #{tpu_custom_call.1} parent=1 // pred_region
      %s14 = ssub.s32 512, 512
      %15 = vsyncadd [#allocation3], %s14
      %s16 = sshll.u32 [#allocation2], 4
      %s17 = int_to_ptr.vmem [resolvable:$true] %s16
      %22 = dma.hbm_to_vmem [thread:$0]  %s0, 512, %s17, [#allocation3], 256, 256, 16
    $region5: #{tpu_custom_call.1} parent=1 // pred_fallthru
      _
    // Predicated region
    $region6: #{tpu_custom_call.1} parent=1 // pred_check
      _
    $region7: #{tpu_custom_call.1} parent=1 // pred_check_branch
      %24 = sbr.rel (0) target = $region9
    $region8: #{tpu_custom_call.1} parent=1 // pred_region
      %s26 = ssub.s32 16384, 16384
      %27 = vsyncadd [#allocation6], %s26
      %s28 = sshll.u32 [#allocation5], 4
      %s29 = int_to_ptr.vmem [resolvable:$true] %s28
      %34 = dma.hbm_to_vmem [thread:$0]  %s1, 16384, %s29, [#allocation6], 512, 512, 32
    $region9: #{tpu_custom_call.1} parent=1 // pred_fallthru
      _
    // Predicated region
    $region10: #{tpu_custom_call.1} parent=1 // pred_check
      _
    $region11: #{tpu_custom_call.1} parent=1 // pred_check_branch
      %36 = sbr.rel (0) target = $region13
    $region12: #{tpu_custom_call.1} parent=1 // pred_region
      %s38 = ssub.s32 512, 512
      %39 = vsyncadd [#allocation6], %s38
      %s41 = sshll.u32 [#allocation7], 4
      %s42 = int_to_ptr.vmem [resolvable:$true] %s41
      %44 = dma.hbm_to_vmem [thread:$0]  %s2, 512, %s42, [#allocation6]
    $region13: #{tpu_custom_call.1} parent=1 // pred_fallthru
      _
    // Predicated region
    $region14: #{tpu_custom_call.1} parent=1 // pred_check
      _
    $region15: #{tpu_custom_call.1} parent=1 // pred_check_branch
      %46 = sbr.rel (0) target = $region17
    $region16: #{tpu_custom_call.1} parent=1 // pred_region
      %47 = dma.done [#allocation3], 512
    $region17: #{tpu_custom_call.1} parent=1 // pred_fallthru
      _
    // Predicated region
    $region18: #{tpu_custom_call.1} parent=1 // pred_check
      _
    $region19: #{tpu_custom_call.1} parent=1 // pred_check_branch
      %49 = sbr.rel (0) target = $region21
    $region20: #{tpu_custom_call.1} parent=1 // pred_region
      %50 = dma.done [#allocation6], 16384
    $region21: #{tpu_custom_call.1} parent=1 // pred_fallthru
      _
    // Predicated region
    $region22: #{tpu_custom_call.1} parent=1 // pred_check
      _
    $region23: #{tpu_custom_call.1} parent=1 // pred_check_branch
      %52 = sbr.rel (0) target = $region25
    $region24: #{tpu_custom_call.1} parent=1 // pred_region
      %53 = dma.done [#allocation6], 512
    $region25: #{tpu_custom_call.1} parent=1 // pred_fallthru
      _
    %v54 = vld [vmem:[#allocation2] sm:$0xff]
    %v55 = vld [vmem:[#allocation2 + $0x8] sm:$0xff]
    %v56 = vld [vmem:[#allocation2 + $0x10] sm:$0xff]
    %v57 = vld [vmem:[#allocation2 + $0x18] sm:$0xff]
    %v58 = vld [vmem:[#allocation5] sm:$0xff]
    %v59 = vld [vmem:[#allocation5 + $0x8] sm:$0xff]
    %v60 = vld [vmem:[#allocation5 + $0x10] sm:$0xff]
    %v61 = vld [vmem:[#allocation5 + $0x18] sm:$0xff]
    %v62 = vld [vmem:[#allocation5 + $0x20] sm:$0xff]
    %v63 = vld [vmem:[#allocation5 + $0x28] sm:$0xff]
    %v64 = vld [vmem:[#allocation5 + $0x30] sm:$0xff]
    %v65 = vld [vmem:[#allocation5 + $0x38] sm:$0xff]
    %v66 = vld [vmem:[#allocation5 + $0x40] sm:$0xff]
    %v67 = vld [vmem:[#allocation5 + $0x48] sm:$0xff]
    %v68 = vld [vmem:[#allocation5 + $0x50] sm:$0xff]
    %v69 = vld [vmem:[#allocation5 + $0x58] sm:$0xff]
    %v70 = vld [vmem:[#allocation5 + $0x60] sm:$0xff]
    %v71 = vld [vmem:[#allocation5 + $0x68] sm:$0xff]
    %v72 = vld [vmem:[#allocation5 + $0x70] sm:$0xff]
    %v73 = vld [vmem:[#allocation5 + $0x78] sm:$0xff]
    %v74 = vld [vmem:[#allocation5 + $0x80] sm:$0xff]
    %v75 = vld [vmem:[#allocation5 + $0x88] sm:$0xff]
    %v76 = vld [vmem:[#allocation5 + $0x90] sm:$0xff]
    %v77 = vld [vmem:[#allocation5 + $0x98] sm:$0xff]
    %v78 = vld [vmem:[#allocation5 + $0xa0] sm:$0xff]
    %v79 = vld [vmem:[#allocation5 + $0xa8] sm:$0xff]
    %v80 = vld [vmem:[#allocation5 + $0xb0] sm:$0xff]
    %v81 = vld [vmem:[#allocation5 + $0xb8] sm:$0xff]
    %v82 = vld [vmem:[#allocation5 + $0xc0] sm:$0xff]
    %v83 = vld [vmem:[#allocation5 + $0xc8] sm:$0xff]
    %v84 = vld [vmem:[#allocation5 + $0xd0] sm:$0xff]
    %v85 = vld [vmem:[#allocation5 + $0xd8] sm:$0xff]
    %v86 = vld [vmem:[#allocation5 + $0xe0] sm:$0xff]
    %v87 = vld [vmem:[#allocation5 + $0xe8] sm:$0xff]
    %v88 = vld [vmem:[#allocation5 + $0xf0] sm:$0xff]
    %v89 = vld [vmem:[#allocation5 + $0xf8] sm:$0xff]
    %v90 = vld [vmem:[#allocation5 + $0x100] sm:$0xff]
    %v91 = vld [vmem:[#allocation5 + $0x108] sm:$0xff]
    %v92 = vld [vmem:[#allocation5 + $0x110] sm:$0xff]
    %v93 = vld [vmem:[#allocation5 + $0x118] sm:$0xff]
    %v94 = vld [vmem:[#allocation5 + $0x120] sm:$0xff]
    %v95 = vld [vmem:[#allocation5 + $0x128] sm:$0xff]
    %v96 = vld [vmem:[#allocation5 + $0x130] sm:$0xff]
    %v97 = vld [vmem:[#allocation5 + $0x138] sm:$0xff]
    %v98 = vld [vmem:[#allocation5 + $0x140] sm:$0xff]
    %v99 = vld [vmem:[#allocation5 + $0x148] sm:$0xff]
    %v100 = vld [vmem:[#allocation5 + $0x150] sm:$0xff]
    %v101 = vld [vmem:[#allocation5 + $0x158] sm:$0xff]
    %v102 = vld [vmem:[#allocation5 + $0x160] sm:$0xff]
    %v103 = vld [vmem:[#allocation5 + $0x168] sm:$0xff]
    %v104 = vld [vmem:[#allocation5 + $0x170] sm:$0xff]
    %v105 = vld [vmem:[#allocation5 + $0x178] sm:$0xff]
    %v106 = vld [vmem:[#allocation5 + $0x180] sm:$0xff]
    %v107 = vld [vmem:[#allocation5 + $0x188] sm:$0xff]
    %v108 = vld [vmem:[#allocation5 + $0x190] sm:$0xff]
    %v109 = vld [vmem:[#allocation5 + $0x198] sm:$0xff]
    %v110 = vld [vmem:[#allocation5 + $0x1a0] sm:$0xff]
    %v111 = vld [vmem:[#allocation5 + $0x1a8] sm:$0xff]
    %v112 = vld [vmem:[#allocation5 + $0x1b0] sm:$0xff]
    %v113 = vld [vmem:[#allocation5 + $0x1b8] sm:$0xff]
    %v114 = vld [vmem:[#allocation5 + $0x1c0] sm:$0xff]
    %v115 = vld [vmem:[#allocation5 + $0x1c8] sm:$0xff]
    %v116 = vld [vmem:[#allocation5 + $0x1d0] sm:$0xff]
    %v117 = vld [vmem:[#allocation5 + $0x1d8] sm:$0xff]
    %v118 = vld [vmem:[#allocation5 + $0x1e0] sm:$0xff]
    %v119 = vld [vmem:[#allocation5 + $0x1e8] sm:$0xff]
    %v120 = vld [vmem:[#allocation5 + $0x1f0] sm:$0xff]
    %v121 = vld [vmem:[#allocation5 + $0x1f8] sm:$0xff]
    %v122 = vld [vmem:[#allocation5 + $0x200] sm:$0xff]
    %v123 = vld [vmem:[#allocation5 + $0x208] sm:$0xff]
    %v124 = vld [vmem:[#allocation5 + $0x210] sm:$0xff]
    %v125 = vld [vmem:[#allocation5 + $0x218] sm:$0xff]
    %v126 = vld [vmem:[#allocation5 + $0x220] sm:$0xff]
    %v127 = vld [vmem:[#allocation5 + $0x228] sm:$0xff]
    %v128 = vld [vmem:[#allocation5 + $0x230] sm:$0xff]
    %v129 = vld [vmem:[#allocation5 + $0x238] sm:$0xff]
    %v130 = vld [vmem:[#allocation5 + $0x240] sm:$0xff]
    %v131 = vld [vmem:[#allocation5 + $0x248] sm:$0xff]
    %v132 = vld [vmem:[#allocation5 + $0x250] sm:$0xff]
    %v133 = vld [vmem:[#allocation5 + $0x258] sm:$0xff]
    %v134 = vld [vmem:[#allocation5 + $0x260] sm:$0xff]
    %v135 = vld [vmem:[#allocation5 + $0x268] sm:$0xff]
    %v136 = vld [vmem:[#allocation5 + $0x270] sm:$0xff]
    %v137 = vld [vmem:[#allocation5 + $0x278] sm:$0xff]
    %v138 = vld [vmem:[#allocation5 + $0x280] sm:$0xff]
    %v139 = vld [vmem:[#allocation5 + $0x288] sm:$0xff]
    %v140 = vld [vmem:[#allocation5 + $0x290] sm:$0xff]
    %v141 = vld [vmem:[#allocation5 + $0x298] sm:$0xff]
    %v142 = vld [vmem:[#allocation5 + $0x2a0] sm:$0xff]
    %v143 = vld [vmem:[#allocation5 + $0x2a8] sm:$0xff]
    %v144 = vld [vmem:[#allocation5 + $0x2b0] sm:$0xff]
    %v145 = vld [vmem:[#allocation5 + $0x2b8] sm:$0xff]
    %v146 = vld [vmem:[#allocation5 + $0x2c0] sm:$0xff]
    %v147 = vld [vmem:[#allocation5 + $0x2c8] sm:$0xff]
    %v148 = vld [vmem:[#allocation5 + $0x2d0] sm:$0xff]
    %v149 = vld [vmem:[#allocation5 + $0x2d8] sm:$0xff]
    %v150 = vld [vmem:[#allocation5 + $0x2e0] sm:$0xff]
    %v151 = vld [vmem:[#allocation5 + $0x2e8] sm:$0xff]
    %v152 = vld [vmem:[#allocation5 + $0x2f0] sm:$0xff]
    %v153 = vld [vmem:[#allocation5 + $0x2f8] sm:$0xff]
    %v154 = vld [vmem:[#allocation5 + $0x300] sm:$0xff]
    %v155 = vld [vmem:[#allocation5 + $0x308] sm:$0xff]
    %v156 = vld [vmem:[#allocation5 + $0x310] sm:$0xff]
    %v157 = vld [vmem:[#allocation5 + $0x318] sm:$0xff]
    %v158 = vld [vmem:[#allocation5 + $0x320] sm:$0xff]
    %v159 = vld [vmem:[#allocation5 + $0x328] sm:$0xff]
    %v160 = vld [vmem:[#allocation5 + $0x330] sm:$0xff]
    %v161 = vld [vmem:[#allocation5 + $0x338] sm:$0xff]
    %v162 = vld [vmem:[#allocation5 + $0x340] sm:$0xff]
    %v163 = vld [vmem:[#allocation5 + $0x348] sm:$0xff]
    %v164 = vld [vmem:[#allocation5 + $0x350] sm:$0xff]
    %v165 = vld [vmem:[#allocation5 + $0x358] sm:$0xff]
    %v166 = vld [vmem:[#allocation5 + $0x360] sm:$0xff]
    %v167 = vld [vmem:[#allocation5 + $0x368] sm:$0xff]
    %v168 = vld [vmem:[#allocation5 + $0x370] sm:$0xff]
    %v169 = vld [vmem:[#allocation5 + $0x378] sm:$0xff]
    %v170 = vld [vmem:[#allocation5 + $0x380] sm:$0xff]
    %v171 = vld [vmem:[#allocation5 + $0x388] sm:$0xff]
    %v172 = vld [vmem:[#allocation5 + $0x390] sm:$0xff]
    %v173 = vld [vmem:[#allocation5 + $0x398] sm:$0xff]
    %v174 = vld [vmem:[#allocation5 + $0x3a0] sm:$0xff]
    %v175 = vld [vmem:[#allocation5 + $0x3a8] sm:$0xff]
    %v176 = vld [vmem:[#allocation5 + $0x3b0] sm:$0xff]
    %v177 = vld [vmem:[#allocation5 + $0x3b8] sm:$0xff]
    %v178 = vld [vmem:[#allocation5 + $0x3c0] sm:$0xff]
    %v179 = vld [vmem:[#allocation5 + $0x3c8] sm:$0xff]
    %v180 = vld [vmem:[#allocation5 + $0x3d0] sm:$0xff]
    %v181 = vld [vmem:[#allocation5 + $0x3d8] sm:$0xff]
    %v182 = vld [vmem:[#allocation5 + $0x3e0] sm:$0xff]
    %v183 = vld [vmem:[#allocation5 + $0x3e8] sm:$0xff]
    %v184 = vld [vmem:[#allocation5 + $0x3f0] sm:$0xff]
    %v185 = vld [vmem:[#allocation5 + $0x3f8] sm:$0xff]
    %v186 = vld [vmem:[#allocation7] sm:$0xff]
    %v187 = vld [vmem:[#allocation7 + $0x8] sm:$0xff]
    %v188 = vld [vmem:[#allocation7 + $0x10] sm:$0xff]
    %v189 = vld [vmem:[#allocation7 + $0x18] sm:$0xff]
    %190 = vmatprep.subr.mxu0 %v119
    %191 = vmatpush1.msra.mxu0 %v118
    %192 = vmatprep.subr.mxu0 %v115
    %193 = vmatpush1.msra.mxu0 %v114
    %194 = vmatprep.subr.mxu0 %v111
    %195 = vmatpush1.msra.mxu0 %v110
    %196 = vmatprep.subr.mxu0 %v107
    %197 = vmatpush1.msra.mxu0 %v106
    %198 = vmatprep.subr.mxu0 %v103
    %199 = vmatpush1.msra.mxu0 %v102
    %200 = vmatprep.subr.mxu0 %v99
    %201 = vmatpush1.msra.mxu0 %v98
    %202 = vmatprep.subr.mxu0 %v95
    %203 = vmatpush1.msra.mxu0 %v94
    %204 = vmatprep.subr.mxu0 %v91
    %205 = vmatpush1.msra.mxu0 %v90
    %206 = vmatprep.subr.mxu0 %v87
    %207 = vmatpush1.msra.mxu0 %v86
    %208 = vmatprep.subr.mxu0 %v83
    %209 = vmatpush1.msra.mxu0 %v82
    %210 = vmatprep.subr.mxu0 %v79
    %211 = vmatpush1.msra.mxu0 %v78
    %212 = vmatprep.subr.mxu0 %v75
    %213 = vmatpush1.msra.mxu0 %v74
    %214 = vmatprep.subr.mxu0 %v71
    %215 = vmatpush1.msra.mxu0 %v70
    %216 = vmatprep.subr.mxu0 %v67
    %217 = vmatpush1.msra.mxu0 %v66
    %218 = vmatprep.subr.mxu0 %v63
    %219 = vmatpush1.msra.mxu0 %v62
    %220 = vmatprep.subr.mxu0 %v59
    %221 = vmatpush1.msra.mxu0 %v58
    %222 = vmatprep.subr.mxu0 %v183
    %223 = vmatpush2.msra.mxu0 %v182
    %224 = vmatprep.subr.mxu0 %v179
    %225 = vmatpush2.msra.mxu0 %v178
    %226 = vmatprep.subr.mxu0 %v175
    %227 = vmatpush2.msra.mxu0 %v174
    %228 = vmatprep.subr.mxu0 %v171
    %229 = vmatpush2.msra.mxu0 %v170
    %230 = vmatprep.subr.mxu0 %v167
    %231 = vmatpush2.msra.mxu0 %v166
    %232 = vmatprep.subr.mxu0 %v163
    %233 = vmatpush2.msra.mxu0 %v162
    %234 = vmatprep.subr.mxu0 %v159
    %235 = vmatpush2.msra.mxu0 %v158
    %236 = vmatprep.subr.mxu0 %v155
    %237 = vmatpush2.msra.mxu0 %v154
    %238 = vmatprep.subr.mxu0 %v151
    %239 = vmatpush2.msra.mxu0 %v150
    %240 = vmatprep.subr.mxu0 %v147
    %241 = vmatpush2.msra.mxu0 %v146
    %242 = vmatprep.subr.mxu0 %v143
    %243 = vmatpush2.msra.mxu0 %v142
    %244 = vmatprep.subr.mxu0 %v139
    %245 = vmatpush2.msra.mxu0 %v138
    %246 = vmatprep.subr.mxu0 %v135
    %247 = vmatpush2.msra.mxu0 %v134
    %248 = vmatprep.subr.mxu0 %v131
    %249 = vmatpush2.msra.mxu0 %v130
    %250 = vmatprep.subr.mxu0 %v127
    %251 = vmatpush2.msra.mxu0 %v126
    %252 = vmatprep.subr.mxu0 %v123
    %253 = vmatpush2.msra.mxu0 %v122
    %254 = vmatprep.mubr.f32.mxu0 %v55
    %255 = vmatmul.mubr.f32.gmra.mxu0 %v54
    %v256 = vpop.f32.mrf.mxu0
    %v257 = vadd.f32 %v186, %v256
    %v258 = vpop.f32.mrf.mxu0
    %v259 = vadd.f32 %v187, %v258
    %260 = vmatprep.mubr.f32.mxu0 %v57
    %261 = vmatmul.mubr.f32.gmra.mxu0 %v56
    %v262 = vpop.f32.mrf.mxu0
    %v263 = vadd.f32 %v186, %v262
    %v264 = vpop.f32.mrf.mxu0
    %v265 = vadd.f32 %v187, %v264
    %266 = vdwg.mxu0
    %267 = vmatprep.subr.mxu0 %v121
    %268 = vmatpush1.msra.mxu0 %v120
    %269 = vmatprep.subr.mxu0 %v117
    %270 = vmatpush1.msra.mxu0 %v116
    %271 = vmatprep.subr.mxu0 %v113
    %272 = vmatpush1.msra.mxu0 %v112
    %273 = vmatprep.subr.mxu0 %v109
    %274 = vmatpush1.msra.mxu0 %v108
    %275 = vmatprep.subr.mxu0 %v105
    %276 = vmatpush1.msra.mxu0 %v104
    %277 = vmatprep.subr.mxu0 %v101
    %278 = vmatpush1.msra.mxu0 %v100
    %279 = vmatprep.subr.mxu0 %v97
    %280 = vmatpush1.msra.mxu0 %v96
    %281 = vmatprep.subr.mxu0 %v93
    %282 = vmatpush1.msra.mxu0 %v92
    %283 = vmatprep.subr.mxu0 %v89
    %284 = vmatpush1.msra.mxu0 %v88
    %285 = vmatprep.subr.mxu0 %v85
    %286 = vmatpush1.msra.mxu0 %v84
    %287 = vmatprep.subr.mxu0 %v81
    %288 = vmatpush1.msra.mxu0 %v80
    %289 = vmatprep.subr.mxu0 %v77
    %290 = vmatpush1.msra.mxu0 %v76
    %291 = vmatprep.subr.mxu0 %v73
    %292 = vmatpush1.msra.mxu0 %v72
    %293 = vmatprep.subr.mxu0 %v69
    %294 = vmatpush1.msra.mxu0 %v68
    %295 = vmatprep.subr.mxu0 %v65
    %296 = vmatpush1.msra.mxu0 %v64
    %297 = vmatprep.subr.mxu0 %v61
    %298 = vmatpush1.msra.mxu0 %v60
    %299 = vmatprep.subr.mxu0 %v185
    %300 = vmatpush2.msra.mxu0 %v184
    %301 = vmatprep.subr.mxu0 %v181
    %302 = vmatpush2.msra.mxu0 %v180
    %303 = vmatprep.subr.mxu0 %v177
    %304 = vmatpush2.msra.mxu0 %v176
    %305 = vmatprep.subr.mxu0 %v173
    %306 = vmatpush2.msra.mxu0 %v172
    %307 = vmatprep.subr.mxu0 %v169
    %308 = vmatpush2.msra.mxu0 %v168
    %309 = vmatprep.subr.mxu0 %v165
    %310 = vmatpush2.msra.mxu0 %v164
    %311 = vmatprep.subr.mxu0 %v161
    %312 = vmatpush2.msra.mxu0 %v160
    %313 = vmatprep.subr.mxu0 %v157
    %314 = vmatpush2.msra.mxu0 %v156
    %315 = vmatprep.subr.mxu0 %v153
    %316 = vmatpush2.msra.mxu0 %v152
    %317 = vmatprep.subr.mxu0 %v149
    %318 = vmatpush2.msra.mxu0 %v148
    %319 = vmatprep.subr.mxu0 %v145
    %320 = vmatpush2.msra.mxu0 %v144
    %321 = vmatprep.subr.mxu0 %v141
    %322 = vmatpush2.msra.mxu0 %v140
    %323 = vmatprep.subr.mxu0 %v137
    %324 = vmatpush2.msra.mxu0 %v136
    %325 = vmatprep.subr.mxu0 %v133
    %326 = vmatpush2.msra.mxu0 %v132
    %327 = vmatprep.subr.mxu0 %v129
    %328 = vmatpush2.msra.mxu0 %v128
    %329 = vmatprep.subr.mxu0 %v125
    %330 = vmatpush2.msra.mxu0 %v124
    %331 = vmatprep.mubr.f32.mxu0 %v55
    %332 = vmatmul.mubr.f32.gmra.mxu0 %v54
    %v333 = vpop.f32.mrf.mxu0
    %v334 = vadd.f32 %v188, %v333
    %v335 = vpop.f32.mrf.mxu0
    %v336 = vadd.f32 %v189, %v335
    %337 = vmatprep.mubr.f32.mxu0 %v57
    %338 = vmatmul.mubr.f32.gmra.mxu0 %v56
    %v339 = vpop.f32.mrf.mxu0
    %v340 = vadd.f32 %v188, %v339
    %v341 = vpop.f32.mrf.mxu0
    %v342 = vadd.f32 %v189, %v341
    %343 = vdwg.mxu0
    %344 = vst [vmem:[#allocation8] sm:$0xff] %v257
    %345 = vst [vmem:[#allocation8 + $0x8] sm:$0xff] %v259
    %346 = vst [vmem:[#allocation8 + $0x10] sm:$0xff] %v334
    %347 = vst [vmem:[#allocation8 + $0x18] sm:$0xff] %v336
    %348 = vst [vmem:[#allocation8 + $0x20] sm:$0xff] %v263
    %349 = vst [vmem:[#allocation8 + $0x28] sm:$0xff] %v265
    %350 = vst [vmem:[#allocation8 + $0x30] sm:$0xff] %v340
    %351 = vst [vmem:[#allocation8 + $0x38] sm:$0xff] %v342
    // Predicated region
    $region26: #{tpu_custom_call.1} parent=1 // pred_check
      _
    $region27: #{tpu_custom_call.1} parent=1 // pred_check_branch
      %353 = sbr.rel (0) target = $region29
    $region28: #{tpu_custom_call.1} parent=1 // pred_region
      %s355 = ssub.s32 1024, 1024
      %356 = vsyncadd [#allocation4], %s355
      %s357 = sshll.u32 [#allocation8], 4
      %s358 = int_to_ptr.vmem [resolvable:$true] %s357
      %363 = dma.vmem_to_hbm [thread:$0]  %s358, 1024, %s3, [#allocation4], 512, 512, 32
    $region29: #{tpu_custom_call.1} parent=1 // pred_fallthru
      _
    // Predicated region
    $region30: #{tpu_custom_call.1} parent=1 // pred_check
      _
    $region31: #{tpu_custom_call.1} parent=1 // pred_check_branch
      %365 = sbr.rel (0) target = $region33
    $region32: #{tpu_custom_call.1} parent=1 // pred_region
      %366 = dma.done [#allocation4], 1024
    $region33: #{tpu_custom_call.1} parent=1 // pred_fallthru
      _
    %367 = vsyncpa [#allocation3], 1
    %368 = vsyncpa [#allocation6], 1
    %369 = vsyncpa [#allocation4], 1

</llo_original>
